<compile_context>
chip_gen: v7x
topology: tpu7x:2x2x1
jax: 0.10.0
libtpu: 0.0.40
codegen_flags: <defaults>
</compile_context>

<pallas_src>
import jax
import jax.numpy as jnp
from jax.experimental import pallas as pl
from jax.experimental.pallas import tpu as pltpu

_FLOAT64_EPS = 2.220446049250313e-16  # torch.finfo(float).eps


def _round_up(n, m):
    return ((n + m - 1) // m) * m


def _dog_kernel(x_ref, mesh_ref, prm_ref, out_ref):
    """One (b, u, p) grid step.

    x_ref:    [B_blk, P_tile] bf16  input pixels (zero-padded, cast in the wrapper)
    mesh_ref: [P_tile, 2]     f32   columns: X mesh, Y mesh (flattened, zero-padded)
    prm_ref:  [8, U_blk]      f32   rows (pre-clamped in the wrapper):
                                    mu_x, mu_y, A_c, A_s, -0.5/s_c^2, -0.5/s_s^2, bias, 0
    out_ref:  [B_blk, U_blk]  f32   resident accumulator across the p grid axis
    """
    p_idx = pl.program_id(2)

    # Per-unit parameters: already clipped / clamped / inverted in the wrapper,
    # so no clip / maximum / divide is executed per grid step.
    prm = prm_ref[...]
    mu_x = prm[0:1, :]          # [1, U_blk]
    mu_y = prm[1:2, :]
    a_c = prm[2:3, :]
    a_s = prm[3:4, :]
    n_c = prm[4:5, :]           # -0.5 / sigma_c**2
    n_s = prm[5:6, :]           # -0.5 / sigma_s**2
    bias = prm[6:7, :]          # zeros when with_bias=False

    # DoG filter bank built directly in [P_tile, U_blk] (lane-dense U, no transpose).
    # Exponent math stays f32 for accuracy (sigma can be ~1/13 -> multiplier ~ -85).
    mesh = mesh_ref[...]
    xm = mesh[:, 0:1]           # [P_tile, 1]
    ym = mesh[:, 1:2]
    dx = xm - mu_x              # [P_tile, U_blk]
    dy = ym - mu_y
    r2 = dx * dx + dy * dy
    dog = (a_c * jnp.exp(r2 * n_c) - a_s * jnp.exp(r2 * n_s)).astype(jnp.bfloat16)

    # Pixel contraction on the MXU: bf16 x bf16 -> f32 accumulate.
    part = jnp.dot(x_ref[...], dog, preferred_element_type=jnp.float32)

    @pl.when(p_idx == 0)
    def _():
        out_ref[...] = part + bias

    @pl.when(p_idx > 0)
    def _():
        out_ref[...] = out_ref[...] + part


def dog_layer_forward(x, params, *, input_size_x, input_size_y, with_bias=False):
    """x: [B, 1, X, Y] (NCHW, C must be 1). Returns [B, num_units] float32."""
    assert x.ndim == 4 and x.shape[1] == 1, "dog_layer expects NCHW input with C == 1"
    B = x.shape[0]
    U = int(jnp.reshape(params["mu_x"], (-1,)).shape[0])
    P = input_size_x * input_size_y
    assert x.shape[2] == input_size_x and x.shape[3] == input_size_y

    # ---- padded / tiled sizes ----
    B_pad = _round_up(max(B, 1), 16)        # bf16 sublane tile (16, 128)
    B_BLK = min(B_pad, 1024)                # batch block: VMEM-bounded + parallel axis
    B_pad = _round_up(B_pad, B_BLK)

    U_pad = _round_up(U, 128)               # lane-dense output
    if U_pad > 256:
        U_BLK = 256                         # documented: x re-read once per unit block
        U_pad = _round_up(U, 256)
    else:
        U_BLK = U_pad                       # single unit block: x streamed exactly once

    P_pad = _round_up(P, 128)
    P_TILE_MAX = 512
    if P_pad > P_TILE_MAX:
        P_TILE = P_TILE_MAX
        P_pad = _round_up(P, P_TILE_MAX)
    else:
        P_TILE = P_pad

    # ---- wrapper-side layout plumbing (plain JAX) ----
    # Flatten NCHW (C=1) spatially, zero-pad batch and pixel axes, stream as bf16.
    # Zero padding keeps the padded pixels/rows contributing exactly 0 to the matmul.
    x_flat = x.astype(jnp.bfloat16).reshape(B, P)
    x_p = jnp.pad(x_flat, ((0, B_pad - B), (0, P_pad - P)))

    # Meshgrids (torch 'ij' indexing), flattened row-major, packed [P_pad, 2] f32.
    x_arr = jnp.linspace(-1.0, 1.0, input_size_x, dtype=jnp.float32)
    y_arr = jnp.linspace(-1.0, 1.0, input_size_y, dtype=jnp.float32)
    X_mesh, Y_mesh = jnp.meshgrid(x_arr, y_arr, indexing="ij")
    mesh = jnp.stack([X_mesh.reshape(P), Y_mesh.reshape(P)], axis=-1)      # [P, 2]
    mesh = jnp.pad(mesh, ((0, P_pad - P), (0, 0)))

    # Per-unit parameter prep, hoisted out of the kernel (clamp, sigma combine,
    # exponent multipliers).  Packed into one [8, U_pad] f32 slab (single DMA).
    def _row(v):
        return jnp.reshape(v.astype(jnp.float32), (U,))

    sigma_lo = 1.0 / max(int(0.82 * input_size_x), int(0.82 * input_size_y))
    mu_x = jnp.clip(_row(params["mu_x"]), -0.8, 0.8)
    mu_y = jnp.clip(_row(params["mu_y"]), -0.8, 0.8)
    a_c = jnp.maximum(_row(params["A_c"]), _FLOAT64_EPS)
    a_s = jnp.maximum(_row(params["A_s"]), _FLOAT64_EPS)
    s_c = jnp.clip(_row(params["sigma_1"]), sigma_lo, 1.0)
    s_s = s_c + jnp.clip(_row(params["sigma_2"]), sigma_lo, 1.0)
    n_c = -0.5 / (s_c * s_c)
    n_s = -0.5 / (s_s * s_s)
    bias_row = _row(params["bias"]) if with_bias else jnp.zeros((U,), jnp.float32)
    prm = jnp.stack(
        [mu_x, mu_y, a_c, a_s, n_c, n_s, bias_row, jnp.zeros((U,), jnp.float32)],
        axis=0,
    )                                               # [8, U]
    # Padded unit columns are all-zero -> dog == 0 there (finite), sliced away below.
    prm = jnp.pad(prm, ((0, 0), (0, U_pad - U)))

    grid = (B_pad // B_BLK, U_pad // U_BLK, P_pad // P_TILE)   # (parallel, parallel, red.)

    out = pl.pallas_call(
        _dog_kernel,
        out_shape=jax.ShapeDtypeStruct((B_pad, U_pad), jnp.float32),
        grid_spec=pltpu.PrefetchScalarGridSpec(
            num_scalar_prefetch=0,
            grid=grid,
            in_specs=[
                pl.BlockSpec((B_BLK, P_TILE), lambda b, u, p: (b, p)),   # x (bf16)
                pl.BlockSpec((P_TILE, 2), lambda b, u, p: (p, 0)),       # mesh
                pl.BlockSpec((8, U_BLK), lambda b, u, p: (0, u)),        # packed params
            ],
            out_specs=pl.BlockSpec((B_BLK, U_BLK), lambda b, u, p: (b, u)),
        ),
        compiler_params=pltpu.CompilerParams(
            dimension_semantics=("parallel", "parallel", "arbitrary"),
            vmem_limit_bytes=48 * 1024 * 1024,   # <= 56 MiB so it also fits v7x VMEM
        ),
    )(x_p, mesh, prm)

    return out[:B, :U]


def _reference_forward(x, params, *, input_size_x, input_size_y, with_bias=False):
    """Pure-JAX f32 reference (mirrors the PyTorch module)."""
    sigma_lo = 1.0 / max(int(0.82 * input_size_x), int(0.82 * input_size_y))
    mu_x = jnp.clip(params["mu_x"], -0.8, 0.8).reshape(-1, 1, 1)
    mu_y = jnp.clip(params["mu_y"], -0.8, 0.8).reshape(-1, 1, 1)
    a_c = jnp.maximum(params["A_c"], _FLOAT64_EPS).reshape(-1, 1, 1)
    a_s = jnp.maximum(params["A_s"], _FLOAT64_EPS).reshape(-1, 1, 1)
    s1 = jnp.clip(params["sigma_1"], sigma_lo, 1.0).reshape(-1, 1, 1)
    s2 = jnp.clip(params["sigma_2"], sigma_lo, 1.0).reshape(-1, 1, 1)
    x_arr = jnp.linspace(-1.0, 1.0, input_size_x, dtype=jnp.float32)
    y_arr = jnp.linspace(-1.0, 1.0, input_size_y, dtype=jnp.float32)
    X, Y = jnp.meshgrid(x_arr, y_arr, indexing="ij")
    X = X[None]; Y = Y[None]
    r2 = (X - mu_x) ** 2 + (Y - mu_y) ** 2
    dog = a_c * jnp.exp(-r2 / (2 * s1 ** 2)) - a_s * jnp.exp(-r2 / (2 * (s1 + s2) ** 2))
    out = jnp.tensordot(x[:, 0], dog, axes=((1, 2), (1, 2)))
    if with_bias:
        out = out + params["bias"]
    return out


def _make_params(key, num_units, size_x, size_y):
    k = jax.random.split(key, 7)
    sigma_lo = 1.0 / max(int(0.82 * size_x), int(0.82 * size_y))
    return {
        # stored as [U, 1] (PyTorch stores [U, 1, 1]); any shape reshapable to [U] works
        "mu_x":    jax.random.uniform(k[0], (num_units, 1), jnp.float32, -0.8, 0.8),
        "mu_y":    jax.random.uniform(k[1], (num_units, 1), jnp.float32, -0.8, 0.8),
        "A_c":     jax.random.uniform(k[2], (num_units, 1), jnp.float32, _FLOAT64_EPS, 4.0),
        "A_s":     jax.random.uniform(k[3], (num_units, 1), jnp.float32, _FLOAT64_EPS, 4.0),
        "sigma_1": jax.random.uniform(k[4], (num_units, 1), jnp.float32, sigma_lo, 1.0),
        "sigma_2": jax.random.uniform(k[5], (num_units, 1), jnp.float32, sigma_lo, 1.0),
        "bias":    jnp.abs(jax.random.normal(k[6], (1, num_units), jnp.float32)),
    }


if __name__ == "__main__":
    key = jax.random.PRNGKey(0)
    k_small, k_big, kx1, kx2 = jax.random.split(key, 4)

    # bf16 MXU operands => compare against the f32 reference with a loose tolerance.
    RTOL, ATOL = 5e-2, 2e-1

    # --- config 1: module defaults (with_bias=False), single pixel tile -----------
    B, U, SX, SY = 2, 8, 16, 16
    params = _make_params(k_small, U, SX, SY)
    x = jax.random.normal(kx1, (B, 1, SX, SY), jnp.float32)   # NCHW, C=1

    out = dog_layer_forward(x, params, input_size_x=SX, input_size_y=SY, with_bias=False)
    out = jax.block_until_ready(out)
    ref = _reference_forward(x, params, input_size_x=SX, input_size_y=SY, with_bias=False)
    assert out.shape == (B, U)
    assert jnp.allclose(out, ref, rtol=RTOL, atol=ATOL), (out, ref)

    # with_bias=True path on the same config
    out_b = dog_layer_forward(x, params, input_size_x=SX, input_size_y=SY, with_bias=True)
    out_b = jax.block_until_ready(out_b)
    ref_b = _reference_forward(x, params, input_size_x=SX, input_size_y=SY, with_bias=True)
    assert out_b.shape == (B, U)
    assert jnp.allclose(out_b, ref_b, rtol=RTOL, atol=ATOL), (out_b, ref_b)

    # --- config 2: non-square image with >1 pixel tile (exercises p accumulation) --
    B2, U2, SX2, SY2 = 3, 10, 40, 20            # P = 800 -> two 512-wide pixel tiles
    params2 = _make_params(k_big, U2, SX2, SY2)
    x2 = jax.random.normal(kx2, (B2, 1, SX2, SY2), jnp.float32)

    out2 = dog_layer_forward(x2, params2, input_size_x=SX2, input_size_y=SY2,
                             with_bias=True)
    out2 = jax.block_until_ready(out2)
    ref2 = _reference_forward(x2, params2, input_size_x=SX2, input_size_y=SY2,
                              with_bias=True)
    assert out2.shape == (B2, U2)
    assert jnp.allclose(out2, ref2, rtol=RTOL, atol=ATOL), (out2, ref2)

    print("KERNEL_OK")
</pallas_src>

<mosaic_0001>
module attributes {stable_mosaic.version = 11 : i64} {
  func.func @_dog_kernel(%arg0: i32, %arg1: i32, %arg2: i32, %arg3: memref<16x256xbf16, #tpu.memory_space<vmem>>, %arg4: memref<256x2xf32, #tpu.memory_space<vmem>>, %arg5: memref<8x128xf32, #tpu.memory_space<vmem>>, %arg6: memref<16x128xf32, #tpu.memory_space<vmem>>) attributes {dimension_semantics = [#tpu.dimension_semantics<parallel>, #tpu.dimension_semantics<parallel>, #tpu.dimension_semantics<arbitrary>], iteration_bounds = array<i64: 1, 1, 1>, scalar_prefetch = 0 : i64, scratch_operands = 0 : i64, tpu.core_type = #tpu.core_type<tc>, window_params = [{transform_indices = @transform_0, window_bounds = array<i64: 16, 256>}, {transform_indices = @transform_1, window_bounds = array<i64: 256, 2>}, {transform_indices = @transform_2, window_bounds = array<i64: 8, 128>}, {transform_indices = @transform_3, window_bounds = array<i64: 16, 128>}]} {
    %c0 = arith.constant 0 : index
    %c0_0 = arith.constant 0 : index
    %0 = vector.load %arg5[%c0, %c0_0] : memref<8x128xf32, #tpu.memory_space<vmem>>, vector<8x128xf32>
    %1 = vector.extract_strided_slice %0 {offsets = [0, 0], sizes = [1, 128], strides = [1, 1]} : vector<8x128xf32> to vector<1x128xf32>
    %2 = vector.extract_strided_slice %0 {offsets = [1, 0], sizes = [1, 128], strides = [1, 1]} : vector<8x128xf32> to vector<1x128xf32>
    %3 = vector.extract_strided_slice %0 {offsets = [2, 0], sizes = [1, 128], strides = [1, 1]} : vector<8x128xf32> to vector<1x128xf32>
    %4 = vector.extract_strided_slice %0 {offsets = [3, 0], sizes = [1, 128], strides = [1, 1]} : vector<8x128xf32> to vector<1x128xf32>
    %5 = vector.extract_strided_slice %0 {offsets = [4, 0], sizes = [1, 128], strides = [1, 1]} : vector<8x128xf32> to vector<1x128xf32>
    %6 = vector.extract_strided_slice %0 {offsets = [5, 0], sizes = [1, 128], strides = [1, 1]} : vector<8x128xf32> to vector<1x128xf32>
    %7 = vector.extract_strided_slice %0 {offsets = [6, 0], sizes = [1, 128], strides = [1, 1]} : vector<8x128xf32> to vector<1x128xf32>
    %c0_1 = arith.constant 0 : index
    %c0_2 = arith.constant 0 : index
    %8 = vector.load %arg4[%c0_1, %c0_2] : memref<256x2xf32, #tpu.memory_space<vmem>>, vector<256x2xf32>
    %9 = vector.extract_strided_slice %8 {offsets = [0, 0], sizes = [256, 1], strides = [1, 1]} : vector<256x2xf32> to vector<256x1xf32>
    %10 = vector.extract_strided_slice %8 {offsets = [0, 1], sizes = [256, 1], strides = [1, 1]} : vector<256x2xf32> to vector<256x1xf32>
    %11 = vector.broadcast %9 : vector<256x1xf32> to vector<256x128xf32>
    %12 = vector.broadcast %1 : vector<1x128xf32> to vector<256x128xf32>
    %13 = arith.subf %11, %12 : vector<256x128xf32>
    %14 = vector.broadcast %10 : vector<256x1xf32> to vector<256x128xf32>
    %15 = vector.broadcast %2 : vector<1x128xf32> to vector<256x128xf32>
    %16 = arith.subf %14, %15 : vector<256x128xf32>
    %17 = arith.mulf %13, %13 : vector<256x128xf32>
    %18 = arith.mulf %16, %16 : vector<256x128xf32>
    %19 = arith.addf %17, %18 : vector<256x128xf32>
    %20 = vector.broadcast %5 : vector<1x128xf32> to vector<256x128xf32>
    %21 = arith.mulf %19, %20 : vector<256x128xf32>
    %22 = math.exp %21 : vector<256x128xf32>
    %23 = vector.broadcast %3 : vector<1x128xf32> to vector<256x128xf32>
    %24 = arith.mulf %23, %22 : vector<256x128xf32>
    %25 = vector.broadcast %6 : vector<1x128xf32> to vector<256x128xf32>
    %26 = arith.mulf %19, %25 : vector<256x128xf32>
    %27 = math.exp %26 : vector<256x128xf32>
    %28 = vector.broadcast %4 : vector<1x128xf32> to vector<256x128xf32>
    %29 = arith.mulf %28, %27 : vector<256x128xf32>
    %30 = arith.subf %24, %29 : vector<256x128xf32>
    %31 = arith.truncf %30 : vector<256x128xf32> to vector<256x128xbf16>
    %c0_3 = arith.constant 0 : index
    %c0_4 = arith.constant 0 : index
    %32 = vector.load %arg3[%c0_3, %c0_4] : memref<16x256xbf16, #tpu.memory_space<vmem>>, vector<16x256xbf16>
    %cst = arith.constant dense<0.000000e+00> : vector<16x128xf32>
    %33 = tpu.matmul %32, %31, %cst {dimension_numbers = #tpu.dot_dimension_numbers<[1], [0], [0], [1], [0, 0, 1, 1], [], []>} : vector<16x256xbf16>, vector<256x128xbf16>, vector<16x128xf32> -> vector<16x128xf32>
    %c0_i32 = arith.constant 0 : i32
    %34 = arith.cmpi eq, %arg2, %c0_i32 : i32
    %35 = arith.extui %34 : i1 to i32
    %c0_i32_5 = arith.constant 0 : i32
    %36 = arith.cmpi ne, %35, %c0_i32_5 : i32
    scf.if %36 {
      %40 = vector.broadcast %7 : vector<1x128xf32> to vector<16x128xf32>
      %41 = arith.addf %33, %40 : vector<16x128xf32>
      %c0_8 = arith.constant 0 : index
      %c0_9 = arith.constant 0 : index
      %42 = vector.load %arg6[%c0_8, %c0_9] : memref<16x128xf32, #tpu.memory_space<vmem>>, vector<16x128xf32>
      tpu.vector_store %arg6[%c0_8, %c0_9], %41 {strides = array<i32>} : memref<16x128xf32, #tpu.memory_space<vmem>>, vector<16x128xf32>,
    } else {
    }
    %c0_i32_6 = arith.constant 0 : i32
    %37 = arith.cmpi sgt, %arg2, %c0_i32_6 : i32
    %38 = arith.extui %37 : i1 to i32
    %c0_i32_7 = arith.constant 0 : i32
    %39 = arith.cmpi ne, %38, %c0_i32_7 : i32
    scf.if %39 {
      %c0_8 = arith.constant 0 : index
      %c0_9 = arith.constant 0 : index
      %40 = vector.load %arg6[%c0_8, %c0_9] : memref<16x128xf32, #tpu.memory_space<vmem>>, vector<16x128xf32>
      %41 = arith.addf %40, %33 : vector<16x128xf32>
      %c0_10 = arith.constant 0 : index
      %c0_11 = arith.constant 0 : index
      %42 = vector.load %arg6[%c0_10, %c0_11] : memref<16x128xf32, #tpu.memory_space<vmem>>, vector<16x128xf32>
      tpu.vector_store %arg6[%c0_10, %c0_11], %41 {strides = array<i32>} : memref<16x128xf32, #tpu.memory_space<vmem>>, vector<16x128xf32>,
    } else {
    }
    return
  }
  func.func @transform_0(%arg0: i32, %arg1: i32, %arg2: i32) -> (i32, i32) {
    %c0_i32 = arith.constant 0 : i32
    return %arg0, %arg2 : i32, i32
  }
  func.func @transform_1(%arg0: i32, %arg1: i32, %arg2: i32) -> (i32, i32) {
    %c0_i32 = arith.constant 0 : i32
    %c0_i32_0 = arith.constant 0 : i32
    return %arg2, %c0_i32 : i32, i32
  }
  func.func @transform_2(%arg0: i32, %arg1: i32, %arg2: i32) -> (i32, i32) {
    %c0_i32 = arith.constant 0 : i32
    %c0_i32_0 = arith.constant 0 : i32
    return %c0_i32, %arg1 : i32, i32
  }
  func.func @transform_3(%arg0: i32, %arg1: i32, %arg2: i32) -> (i32, i32) {
    %c0_i32 = arith.constant 0 : i32
    return %arg0, %arg1 : i32, i32
  }
}

</mosaic_0001>

<llo_original>
// kernel: tpu_custom_call.1
$region0: #{tpu_custom_call.1}
  #allocation0 [shape = 'u32[]', space=smem, size = 0x4, offset = 0x4, fixed_abs, tag = 'smem constant byte address 0x4 - core index']
  #allocation1 [shape = 'u32[144,128]{1,0:T(1,128)}', space=vmem, size = 0x12000, scoped, tag = 'internal scratch']
  %s0 = inlined_call_operand.vmem [shape: bf16[16,256], index: 0, kind: input, shape index: {}]
  %s1 = inlined_call_operand.vmem [shape: f32[256,2], index: 1, kind: input, shape index: {}]
  %s2 = inlined_call_operand.vmem [shape: f32[8,128], index: 2, kind: input, shape index: {}]
  %s3 = inlined_call_operand.hbm [shape: f32[16,128], index: 3, kind: output, shape index: {}]
  %s4 = sld [smem:[#allocation0]]
  $region30: #{tpu_custom_call.1} parent=0
    _
  %s6 = ssub.s32 1, %s4
  %s7 = scalar_select 0, %s6, %s4
  $region1: #{tpu_custom_call.1} parent=0
    #allocation2 [shape = 'u8[8192]{0}', space=vmem, size = 0x2000, scoped, tag = 'output window, operand 0, single buffered']
    #allocation3 [shape = 's32[1]{0}', space=sflag, size = 0x4, scoped, tag = 'scoped memory for tpu_custom_call.1']
    %8 = vsyncpa [#allocation3], 0
    // Predicated region
    $region2: #{tpu_custom_call.1} parent=1 // pred_check
      _
    $region3: #{tpu_custom_call.1} parent=1 // pred_check_branch
      %10 = sbr.rel (0) target = $region5
    $region4: #{tpu_custom_call.1} parent=1 // pred_region
      _
    $region5: #{tpu_custom_call.1} parent=1 // pred_fallthru
      _
    // Predicated region
    $region6: #{tpu_custom_call.1} parent=1 // pred_check
      _
    $region7: #{tpu_custom_call.1} parent=1 // pred_check_branch
      %12 = sbr.rel (0) target = $region9
    $region8: #{tpu_custom_call.1} parent=1 // pred_region
      _
    $region9: #{tpu_custom_call.1} parent=1 // pred_fallthru
      _
    // Predicated region
    $region10: #{tpu_custom_call.1} parent=1 // pred_check
      _
    $region11: #{tpu_custom_call.1} parent=1 // pred_check_branch
      %14 = sbr.rel (0) target = $region13
    $region12: #{tpu_custom_call.1} parent=1 // pred_region
      _
    $region13: #{tpu_custom_call.1} parent=1 // pred_fallthru
      _
    %v16 = vld [vmem:[%s2] sm:$0xff]
    %v17 = vld [vmem:[%s1] sm:$0xff]
    %v18 = vld [vmem:[%s1 + $0x8] sm:$0xff]
    %v19 = vld [vmem:[%s1 + $0x10] sm:$0xff]
    %v20 = vld [vmem:[%s1 + $0x18] sm:$0xff]
    %v21 = vld [vmem:[%s1 + $0x20] sm:$0xff]
    %v22 = vld [vmem:[%s1 + $0x28] sm:$0xff]
    %v23 = vld [vmem:[%s1 + $0x30] sm:$0xff]
    %v24 = vld [vmem:[%s1 + $0x38] sm:$0xff]
    %v25 = vld [vmem:[%s1 + $0x40] sm:$0xff]
    %v26 = vld [vmem:[%s1 + $0x48] sm:$0xff]
    %v27 = vld [vmem:[%s1 + $0x50] sm:$0xff]
    %v28 = vld [vmem:[%s1 + $0x58] sm:$0xff]
    %v29 = vld [vmem:[%s1 + $0x60] sm:$0xff]
    %v30 = vld [vmem:[%s1 + $0x68] sm:$0xff]
    %v31 = vld [vmem:[%s1 + $0x70] sm:$0xff]
    %v32 = vld [vmem:[%s1 + $0x78] sm:$0xff]
    %v33 = vld [vmem:[%s1 + $0x80] sm:$0xff]
    %v34 = vld [vmem:[%s1 + $0x88] sm:$0xff]
    %v35 = vld [vmem:[%s1 + $0x90] sm:$0xff]
    %v36 = vld [vmem:[%s1 + $0x98] sm:$0xff]
    %v37 = vld [vmem:[%s1 + $0xa0] sm:$0xff]
    %v38 = vld [vmem:[%s1 + $0xa8] sm:$0xff]
    %v39 = vld [vmem:[%s1 + $0xb0] sm:$0xff]
    %v40 = vld [vmem:[%s1 + $0xb8] sm:$0xff]
    %v41 = vld [vmem:[%s1 + $0xc0] sm:$0xff]
    %v42 = vld [vmem:[%s1 + $0xc8] sm:$0xff]
    %v43 = vld [vmem:[%s1 + $0xd0] sm:$0xff]
    %v44 = vld [vmem:[%s1 + $0xd8] sm:$0xff]
    %v45 = vld [vmem:[%s1 + $0xe0] sm:$0xff]
    %v46 = vld [vmem:[%s1 + $0xe8] sm:$0xff]
    %v47 = vld [vmem:[%s1 + $0xf0] sm:$0xff]
    %v48 = vld [vmem:[%s1 + $0xf8] sm:$0xff]
    %50 = vset.pattern.permute.xlu0 0
    %51 = vperm.xlu0 %50, %v17
    %v52 = vpop.permute.xlu0 %51
    %55 = vset.pattern.permute.xlu0 0
    %56 = vperm.xlu0 %55, %v18
    %v57 = vpop.permute.xlu0 %56
    %60 = vset.pattern.permute.xlu0 0
    %61 = vperm.xlu0 %60, %v19
    %v62 = vpop.permute.xlu0 %61
    %65 = vset.pattern.permute.xlu0 0
    %66 = vperm.xlu0 %65, %v20
    %v67 = vpop.permute.xlu0 %66
    %70 = vset.pattern.permute.xlu0 0
    %71 = vperm.xlu0 %70, %v21
    %v72 = vpop.permute.xlu0 %71
    %75 = vset.pattern.permute.xlu0 0
    %76 = vperm.xlu0 %75, %v22
    %v77 = vpop.permute.xlu0 %76
    %80 = vset.pattern.permute.xlu0 0
    %81 = vperm.xlu0 %80, %v23
    %v82 = vpop.permute.xlu0 %81
    %85 = vset.pattern.permute.xlu0 0
    %86 = vperm.xlu0 %85, %v24
    %v87 = vpop.permute.xlu0 %86
    %90 = vset.pattern.permute.xlu0 0
    %91 = vperm.xlu0 %90, %v25
    %v92 = vpop.permute.xlu0 %91
    %95 = vset.pattern.permute.xlu0 0
    %96 = vperm.xlu0 %95, %v26
    %v97 = vpop.permute.xlu0 %96
    %100 = vset.pattern.permute.xlu0 0
    %101 = vperm.xlu0 %100, %v27
    %v102 = vpop.permute.xlu0 %101
    %105 = vset.pattern.permute.xlu0 0
    %106 = vperm.xlu0 %105, %v28
    %v107 = vpop.permute.xlu0 %106
    %110 = vset.pattern.permute.xlu0 0
    %111 = vperm.xlu0 %110, %v29
    %v112 = vpop.permute.xlu0 %111
    %115 = vset.pattern.permute.xlu0 0
    %116 = vperm.xlu0 %115, %v30
    %v117 = vpop.permute.xlu0 %116
    %120 = vset.pattern.permute.xlu0 0
    %121 = vperm.xlu0 %120, %v31
    %v122 = vpop.permute.xlu0 %121
    %125 = vset.pattern.permute.xlu0 0
    %126 = vperm.xlu0 %125, %v32
    %v127 = vpop.permute.xlu0 %126
    %130 = vset.pattern.permute.xlu0 0
    %131 = vperm.xlu0 %130, %v33
    %v132 = vpop.permute.xlu0 %131
    %135 = vset.pattern.permute.xlu0 0
    %136 = vperm.xlu0 %135, %v34
    %v137 = vpop.permute.xlu0 %136
    %140 = vset.pattern.permute.xlu0 0
    %141 = vperm.xlu0 %140, %v35
    %v142 = vpop.permute.xlu0 %141
    %145 = vset.pattern.permute.xlu0 0
    %146 = vperm.xlu0 %145, %v36
    %v147 = vpop.permute.xlu0 %146
    %150 = vset.pattern.permute.xlu0 0
    %151 = vperm.xlu0 %150, %v37
    %v152 = vpop.permute.xlu0 %151
    %155 = vset.pattern.permute.xlu0 0
    %156 = vperm.xlu0 %155, %v38
    %v157 = vpop.permute.xlu0 %156
    %160 = vset.pattern.permute.xlu0 0
    %161 = vperm.xlu0 %160, %v39
    %v162 = vpop.permute.xlu0 %161
    %165 = vset.pattern.permute.xlu0 0
    %166 = vperm.xlu0 %165, %v40
    %v167 = vpop.permute.xlu0 %166
    %170 = vset.pattern.permute.xlu0 0
    %171 = vperm.xlu0 %170, %v41
    %v172 = vpop.permute.xlu0 %171
    %175 = vset.pattern.permute.xlu0 0
    %176 = vperm.xlu0 %175, %v42
    %v177 = vpop.permute.xlu0 %176
    %180 = vset.pattern.permute.xlu0 0
    %181 = vperm.xlu0 %180, %v43
    %v182 = vpop.permute.xlu0 %181
    %185 = vset.pattern.permute.xlu0 0
    %186 = vperm.xlu0 %185, %v44
    %v187 = vpop.permute.xlu0 %186
    %190 = vset.pattern.permute.xlu0 0
    %191 = vperm.xlu0 %190, %v45
    %v192 = vpop.permute.xlu0 %191
    %195 = vset.pattern.permute.xlu0 0
    %196 = vperm.xlu0 %195, %v46
    %v197 = vpop.permute.xlu0 %196
    %200 = vset.pattern.permute.xlu0 0
    %201 = vperm.xlu0 %200, %v47
    %v202 = vpop.permute.xlu0 %201
    %205 = vset.pattern.permute.xlu0 0
    %206 = vperm.xlu0 %205, %v48
    %v207 = vpop.permute.xlu0 %206
    %v209 = vlaneseq
    %v210 = vshrl.u32 %v209, 7
    %v211 = vsub.s32 0, %v210
    %v212 = vrot.slane %v16, %v211
    %v213 = vsub.f32 %v52, %v212
    %v214 = vsub.f32 %v57, %v212
    %v215 = vsub.f32 %v62, %v212
    %v216 = vsub.f32 %v67, %v212
    %v217 = vsub.f32 %v72, %v212
    %v218 = vsub.f32 %v77, %v212
    %v219 = vsub.f32 %v82, %v212
    %v220 = vsub.f32 %v87, %v212
    %v221 = vsub.f32 %v92, %v212
    %v222 = vsub.f32 %v97, %v212
    %v223 = vsub.f32 %v102, %v212
    %v224 = vsub.f32 %v107, %v212
    %v225 = vsub.f32 %v112, %v212
    %v226 = vsub.f32 %v117, %v212
    %v227 = vsub.f32 %v122, %v212
    %v228 = vsub.f32 %v127, %v212
    %v229 = vsub.f32 %v132, %v212
    %v230 = vsub.f32 %v137, %v212
    %v231 = vsub.f32 %v142, %v212
    %v232 = vsub.f32 %v147, %v212
    %v233 = vsub.f32 %v152, %v212
    %v234 = vsub.f32 %v157, %v212
    %v235 = vsub.f32 %v162, %v212
    %v236 = vsub.f32 %v167, %v212
    %v237 = vsub.f32 %v172, %v212
    %v238 = vsub.f32 %v177, %v212
    %v239 = vsub.f32 %v182, %v212
    %v240 = vsub.f32 %v187, %v212
    %v241 = vsub.f32 %v192, %v212
    %v242 = vsub.f32 %v197, %v212
    %v243 = vsub.f32 %v202, %v212
    %v244 = vsub.f32 %v207, %v212
    %245 = vset.pattern.permute.xlu0 1
    %246 = vperm.xlu0 %245, %v17
    %v247 = vpop.permute.xlu0 %246
    %249 = vset.pattern.permute.xlu0 1
    %250 = vperm.xlu0 %249, %v18
    %v251 = vpop.permute.xlu0 %250
    %253 = vset.pattern.permute.xlu0 1
    %254 = vperm.xlu0 %253, %v19
    %v255 = vpop.permute.xlu0 %254
    %257 = vset.pattern.permute.xlu0 1
    %258 = vperm.xlu0 %257, %v20
    %v259 = vpop.permute.xlu0 %258
    %261 = vset.pattern.permute.xlu0 1
    %262 = vperm.xlu0 %261, %v21
    %v263 = vpop.permute.xlu0 %262
    %265 = vset.pattern.permute.xlu0 1
    %266 = vperm.xlu0 %265, %v22
    %v267 = vpop.permute.xlu0 %266
    %269 = vset.pattern.permute.xlu0 1
    %270 = vperm.xlu0 %269, %v23
    %v271 = vpop.permute.xlu0 %270
    %273 = vset.pattern.permute.xlu0 1
    %274 = vperm.xlu0 %273, %v24
    %v275 = vpop.permute.xlu0 %274
    %277 = vset.pattern.permute.xlu0 1
    %278 = vperm.xlu0 %277, %v25
    %v279 = vpop.permute.xlu0 %278
    %281 = vset.pattern.permute.xlu0 1
    %282 = vperm.xlu0 %281, %v26
    %v283 = vpop.permute.xlu0 %282
    %285 = vset.pattern.permute.xlu0 1
    %286 = vperm.xlu0 %285, %v27
    %v287 = vpop.permute.xlu0 %286
    %289 = vset.pattern.permute.xlu0 1
    %290 = vperm.xlu0 %289, %v28
    %v291 = vpop.permute.xlu0 %290
    %293 = vset.pattern.permute.xlu0 1
    %294 = vperm.xlu0 %293, %v29
    %v295 = vpop.permute.xlu0 %294
    %297 = vset.pattern.permute.xlu0 1
    %298 = vperm.xlu0 %297, %v30
    %v299 = vpop.permute.xlu0 %298
    %301 = vset.pattern.permute.xlu0 1
    %302 = vperm.xlu0 %301, %v31
    %v303 = vpop.permute.xlu0 %302
    %305 = vset.pattern.permute.xlu0 1
    %306 = vperm.xlu0 %305, %v32
    %v307 = vpop.permute.xlu0 %306
    %309 = vset.pattern.permute.xlu0 1
    %310 = vperm.xlu0 %309, %v33
    %v311 = vpop.permute.xlu0 %310
    %313 = vset.pattern.permute.xlu0 1
    %314 = vperm.xlu0 %313, %v34
    %v315 = vpop.permute.xlu0 %314
    %317 = vset.pattern.permute.xlu0 1
    %318 = vperm.xlu0 %317, %v35
    %v319 = vpop.permute.xlu0 %318
    %321 = vset.pattern.permute.xlu0 1
    %322 = vperm.xlu0 %321, %v36
    %v323 = vpop.permute.xlu0 %322
    %325 = vset.pattern.permute.xlu0 1
    %326 = vperm.xlu0 %325, %v37
    %v327 = vpop.permute.xlu0 %326
    %329 = vset.pattern.permute.xlu0 1
    %330 = vperm.xlu0 %329, %v38
    %v331 = vpop.permute.xlu0 %330
    %333 = vset.pattern.permute.xlu0 1
    %334 = vperm.xlu0 %333, %v39
    %v335 = vpop.permute.xlu0 %334
    %337 = vset.pattern.permute.xlu0 1
    %338 = vperm.xlu0 %337, %v40
    %v339 = vpop.permute.xlu0 %338
    %341 = vset.pattern.permute.xlu0 1
    %342 = vperm.xlu0 %341, %v41
    %v343 = vpop.permute.xlu0 %342
    %345 = vset.pattern.permute.xlu0 1
    %346 = vperm.xlu0 %345, %v42
    %v347 = vpop.permute.xlu0 %346
    %349 = vset.pattern.permute.xlu0 1
    %350 = vperm.xlu0 %349, %v43
    %v351 = vpop.permute.xlu0 %350
    %353 = vset.pattern.permute.xlu0 1
    %354 = vperm.xlu0 %353, %v44
    %v355 = vpop.permute.xlu0 %354
    %357 = vset.pattern.permute.xlu0 1
    %358 = vperm.xlu0 %357, %v45
    %v359 = vpop.permute.xlu0 %358
    %361 = vset.pattern.permute.xlu0 1
    %362 = vperm.xlu0 %361, %v46
    %v363 = vpop.permute.xlu0 %362
    %365 = vset.pattern.permute.xlu0 1
    %366 = vperm.xlu0 %365, %v47
    %v367 = vpop.permute.xlu0 %366
    %369 = vset.pattern.permute.xlu0 1
    %370 = vperm.xlu0 %369, %v48
    %v371 = vpop.permute.xlu0 %370
    %v373 = vlaneseq
    %v374 = vshrl.u32 %v373, 7
    %v375 = vsub.s32 1, %v374
    %v376 = vrot.slane %v16, %v375
    %v377 = vsub.f32 %v247, %v376
    %v378 = vsub.f32 %v251, %v376
    %v379 = vsub.f32 %v255, %v376
    %v380 = vsub.f32 %v259, %v376
    %v381 = vsub.f32 %v263, %v376
    %v382 = vsub.f32 %v267, %v376
    %v383 = vsub.f32 %v271, %v376
    %v384 = vsub.f32 %v275, %v376
    %v385 = vsub.f32 %v279, %v376
    %v386 = vsub.f32 %v283, %v376
    %v387 = vsub.f32 %v287, %v376
    %v388 = vsub.f32 %v291, %v376
    %v389 = vsub.f32 %v295, %v376
    %v390 = vsub.f32 %v299, %v376
    %v391 = vsub.f32 %v303, %v376
    %v392 = vsub.f32 %v307, %v376
    %v393 = vsub.f32 %v311, %v376
    %v394 = vsub.f32 %v315, %v376
    %v395 = vsub.f32 %v319, %v376
    %v396 = vsub.f32 %v323, %v376
    %v397 = vsub.f32 %v327, %v376
    %v398 = vsub.f32 %v331, %v376
    %v399 = vsub.f32 %v335, %v376
    %v400 = vsub.f32 %v339, %v376
    %v401 = vsub.f32 %v343, %v376
    %v402 = vsub.f32 %v347, %v376
    %v403 = vsub.f32 %v351, %v376
    %v404 = vsub.f32 %v355, %v376
    %v405 = vsub.f32 %v359, %v376
    %v406 = vsub.f32 %v363, %v376
    %v407 = vsub.f32 %v367, %v376
    %v408 = vsub.f32 %v371, %v376
    %v409 = vmul.f32 %v213, %v213
    %v410 = vmul.f32 %v214, %v214
    %v411 = vmul.f32 %v215, %v215
    %v412 = vmul.f32 %v216, %v216
    %v413 = vmul.f32 %v217, %v217
    %v414 = vmul.f32 %v218, %v218
    %v415 = vmul.f32 %v219, %v219
    %v416 = vmul.f32 %v220, %v220
    %v417 = vmul.f32 %v221, %v221
    %v418 = vmul.f32 %v222, %v222
    %v419 = vmul.f32 %v223, %v223
    %v420 = vmul.f32 %v224, %v224
    %v421 = vmul.f32 %v225, %v225
    %v422 = vmul.f32 %v226, %v226
    %v423 = vmul.f32 %v227, %v227
    %v424 = vmul.f32 %v228, %v228
    %v425 = vmul.f32 %v229, %v229
    %v426 = vmul.f32 %v230, %v230
    %v427 = vmul.f32 %v231, %v231
    %v428 = vmul.f32 %v232, %v232
    %v429 = vmul.f32 %v233, %v233
    %v430 = vmul.f32 %v234, %v234
    %v431 = vmul.f32 %v235, %v235
    %v432 = vmul.f32 %v236, %v236
    %v433 = vmul.f32 %v237, %v237
    %v434 = vmul.f32 %v238, %v238
    %v435 = vmul.f32 %v239, %v239
    %v436 = vmul.f32 %v240, %v240
    %v437 = vmul.f32 %v241, %v241
    %v438 = vmul.f32 %v242, %v242
    %v439 = vmul.f32 %v243, %v243
    %v440 = vmul.f32 %v244, %v244
    %v441 = vmul.f32 %v377, %v377
    %v442 = vmul.f32 %v378, %v378
    %v443 = vmul.f32 %v379, %v379
    %v444 = vmul.f32 %v380, %v380
    %v445 = vmul.f32 %v381, %v381
    %v446 = vmul.f32 %v382, %v382
    %v447 = vmul.f32 %v383, %v383
    %v448 = vmul.f32 %v384, %v384
    %v449 = vmul.f32 %v385, %v385
    %v450 = vmul.f32 %v386, %v386
    %v451 = vmul.f32 %v387, %v387
    %v452 = vmul.f32 %v388, %v388
    %v453 = vmul.f32 %v389, %v389
    %v454 = vmul.f32 %v390, %v390
    %v455 = vmul.f32 %v391, %v391
    %v456 = vmul.f32 %v392, %v392
    %v457 = vmul.f32 %v393, %v393
    %v458 = vmul.f32 %v394, %v394
    %v459 = vmul.f32 %v395, %v395
    %v460 = vmul.f32 %v396, %v396
    %v461 = vmul.f32 %v397, %v397
    %v462 = vmul.f32 %v398, %v398
    %v463 = vmul.f32 %v399, %v399
    %v464 = vmul.f32 %v400, %v400
    %v465 = vmul.f32 %v401, %v401
    %v466 = vmul.f32 %v402, %v402
    %v467 = vmul.f32 %v403, %v403
    %v468 = vmul.f32 %v404, %v404
    %v469 = vmul.f32 %v405, %v405
    %v470 = vmul.f32 %v406, %v406
    %v471 = vmul.f32 %v407, %v407
    %v472 = vmul.f32 %v408, %v408
    %v473 = vadd.f32 %v409, %v441
    %v474 = vadd.f32 %v410, %v442
    %v475 = vadd.f32 %v411, %v443
    %v476 = vadd.f32 %v412, %v444
    %v477 = vadd.f32 %v413, %v445
    %v478 = vadd.f32 %v414, %v446
    %v479 = vadd.f32 %v415, %v447
    %v480 = vadd.f32 %v416, %v448
    %v481 = vadd.f32 %v417, %v449
    %v482 = vadd.f32 %v418, %v450
    %v483 = vadd.f32 %v419, %v451
    %v484 = vadd.f32 %v420, %v452
    %v485 = vadd.f32 %v421, %v453
    %v486 = vadd.f32 %v422, %v454
    %v487 = vadd.f32 %v423, %v455
    %v488 = vadd.f32 %v424, %v456
    %v489 = vadd.f32 %v425, %v457
    %v490 = vadd.f32 %v426, %v458
    %v491 = vadd.f32 %v427, %v459
    %v492 = vadd.f32 %v428, %v460
    %v493 = vadd.f32 %v429, %v461
    %v494 = vadd.f32 %v430, %v462
    %v495 = vadd.f32 %v431, %v463
    %v496 = vadd.f32 %v432, %v464
    %v497 = vadd.f32 %v433, %v465
    %v498 = vadd.f32 %v434, %v466
    %v499 = vadd.f32 %v435, %v467
    %v500 = vadd.f32 %v436, %v468
    %v501 = vadd.f32 %v437, %v469
    %v502 = vadd.f32 %v438, %v470
    %v503 = vadd.f32 %v439, %v471
    %v504 = vadd.f32 %v440, %v472
    %v505 = vlaneseq
    %v506 = vshrl.u32 %v505, 7
    %v507 = vsub.s32 4, %v506
    %v508 = vrot.slane %v16, %v507
    %v509 = vmul.f32 %v473, %v508
    %v510 = vmul.f32 %v474, %v508
    %v511 = vmul.f32 %v475, %v508
    %v512 = vmul.f32 %v476, %v508
    %v513 = vmul.f32 %v477, %v508
    %v514 = vmul.f32 %v478, %v508
    %v515 = vmul.f32 %v479, %v508
    %v516 = vmul.f32 %v480, %v508
    %v517 = vmul.f32 %v481, %v508
    %v518 = vmul.f32 %v482, %v508
    %v519 = vmul.f32 %v483, %v508
    %v520 = vmul.f32 %v484, %v508
    %v521 = vmul.f32 %v485, %v508
    %v522 = vmul.f32 %v486, %v508
    %v523 = vmul.f32 %v487, %v508
    %v524 = vmul.f32 %v488, %v508
    %v525 = vmul.f32 %v489, %v508
    %v526 = vmul.f32 %v490, %v508
    %v527 = vmul.f32 %v491, %v508
    %v528 = vmul.f32 %v492, %v508
    %v529 = vmul.f32 %v493, %v508
    %v530 = vmul.f32 %v494, %v508
    %v531 = vmul.f32 %v495, %v508
    %v532 = vmul.f32 %v496, %v508
    %v533 = vmul.f32 %v497, %v508
    %v534 = vmul.f32 %v498, %v508
    %v535 = vmul.f32 %v499, %v508
    %v536 = vmul.f32 %v500, %v508
    %v537 = vmul.f32 %v501, %v508
    %v538 = vmul.f32 %v502, %v508
    %v539 = vmul.f32 %v503, %v508
    %v540 = vmul.f32 %v504, %v508
    %v541 = vmul.f32 %v509, 1.442695
    %v542 = vpow.pop %v541
    %v543 = vmul.f32 %v510, 1.442695
    %v544 = vpow.pop %v543
    %v545 = vmul.f32 %v511, 1.442695
    %v546 = vpow.pop %v545
    %v547 = vmul.f32 %v512, 1.442695
    %v548 = vpow.pop %v547
    %v549 = vmul.f32 %v513, 1.442695
    %v550 = vpow.pop %v549
    %v551 = vmul.f32 %v514, 1.442695
    %v552 = vpow.pop %v551
    %v553 = vmul.f32 %v515, 1.442695
    %v554 = vpow.pop %v553
    %v555 = vmul.f32 %v516, 1.442695
    %v556 = vpow.pop %v555
    %v557 = vmul.f32 %v517, 1.442695
    %v558 = vpow.pop %v557
    %v559 = vmul.f32 %v518, 1.442695
    %v560 = vpow.pop %v559
    %v561 = vmul.f32 %v519, 1.442695
    %v562 = vpow.pop %v561
    %v563 = vmul.f32 %v520, 1.442695
    %v564 = vpow.pop %v563
    %v565 = vmul.f32 %v521, 1.442695
    %v566 = vpow.pop %v565
    %v567 = vmul.f32 %v522, 1.442695
    %v568 = vpow.pop %v567
    %v569 = vmul.f32 %v523, 1.442695
    %v570 = vpow.pop %v569
    %v571 = vmul.f32 %v524, 1.442695
    %v572 = vpow.pop %v571
    %v573 = vmul.f32 %v525, 1.442695
    %v574 = vpow.pop %v573
    %v575 = vmul.f32 %v526, 1.442695
    %v576 = vpow.pop %v575
    %v577 = vmul.f32 %v527, 1.442695
    %v578 = vpow.pop %v577
    %v579 = vmul.f32 %v528, 1.442695
    %v580 = vpow.pop %v579
    %v581 = vmul.f32 %v529, 1.442695
    %v582 = vpow.pop %v581
    %v583 = vmul.f32 %v530, 1.442695
    %v584 = vpow.pop %v583
    %v585 = vmul.f32 %v531, 1.442695
    %v586 = vpow.pop %v585
    %v587 = vmul.f32 %v532, 1.442695
    %v588 = vpow.pop %v587
    %v589 = vmul.f32 %v533, 1.442695
    %v590 = vpow.pop %v589
    %v591 = vmul.f32 %v534, 1.442695
    %v592 = vpow.pop %v591
    %v593 = vmul.f32 %v535, 1.442695
    %v594 = vpow.pop %v593
    %v595 = vmul.f32 %v536, 1.442695
    %v596 = vpow.pop %v595
    %v597 = vmul.f32 %v537, 1.442695
    %v598 = vpow.pop %v597
    %v599 = vmul.f32 %v538, 1.442695
    %v600 = vpow.pop %v599
    %v601 = vmul.f32 %v539, 1.442695
    %v602 = vpow.pop %v601
    %v603 = vmul.f32 %v540, 1.442695
    %v604 = vpow.pop %v603
    %v605 = vlaneseq
    %v606 = vshrl.u32 %v605, 7
    %v607 = vsub.s32 2, %v606
    %v608 = vrot.slane %v16, %v607
    %v609 = vmul.f32 %v608, %v542
    %v610 = vmul.f32 %v608, %v544
    %v611 = vmul.f32 %v608, %v546
    %v612 = vmul.f32 %v608, %v548
    %v613 = vmul.f32 %v608, %v550
    %v614 = vmul.f32 %v608, %v552
    %v615 = vmul.f32 %v608, %v554
    %v616 = vmul.f32 %v608, %v556
    %v617 = vmul.f32 %v608, %v558
    %v618 = vmul.f32 %v608, %v560
    %v619 = vmul.f32 %v608, %v562
    %v620 = vmul.f32 %v608, %v564
    %v621 = vmul.f32 %v608, %v566
    %v622 = vmul.f32 %v608, %v568
    %v623 = vmul.f32 %v608, %v570
    %v624 = vmul.f32 %v608, %v572
    %v625 = vmul.f32 %v608, %v574
    %v626 = vmul.f32 %v608, %v576
    %v627 = vmul.f32 %v608, %v578
    %v628 = vmul.f32 %v608, %v580
    %v629 = vmul.f32 %v608, %v582
    %v630 = vmul.f32 %v608, %v584
    %v631 = vmul.f32 %v608, %v586
    %v632 = vmul.f32 %v608, %v588
    %v633 = vmul.f32 %v608, %v590
    %v634 = vmul.f32 %v608, %v592
    %v635 = vmul.f32 %v608, %v594
    %v636 = vmul.f32 %v608, %v596
    %v637 = vmul.f32 %v608, %v598
    %v638 = vmul.f32 %v608, %v600
    %v639 = vmul.f32 %v608, %v602
    %v640 = vmul.f32 %v608, %v604
    %v641 = vlaneseq
    %v642 = vshrl.u32 %v641, 7
    %v643 = vsub.s32 5, %v642
    %v644 = vrot.slane %v16, %v643
    %v645 = vmul.f32 %v473, %v644
    %v646 = vmul.f32 %v474, %v644
    %v647 = vmul.f32 %v475, %v644
    %v648 = vmul.f32 %v476, %v644
    %v649 = vmul.f32 %v477, %v644
    %v650 = vmul.f32 %v478, %v644
    %v651 = vmul.f32 %v479, %v644
    %v652 = vmul.f32 %v480, %v644
    %v653 = vmul.f32 %v481, %v644
    %v654 = vmul.f32 %v482, %v644
    %v655 = vmul.f32 %v483, %v644
    %v656 = vmul.f32 %v484, %v644
    %v657 = vmul.f32 %v485, %v644
    %v658 = vmul.f32 %v486, %v644
    %v659 = vmul.f32 %v487, %v644
    %v660 = vmul.f32 %v488, %v644
    %v661 = vmul.f32 %v489, %v644
    %v662 = vmul.f32 %v490, %v644
    %v663 = vmul.f32 %v491, %v644
    %v664 = vmul.f32 %v492, %v644
    %v665 = vmul.f32 %v493, %v644
    %v666 = vmul.f32 %v494, %v644
    %v667 = vmul.f32 %v495, %v644
    %v668 = vmul.f32 %v496, %v644
    %v669 = vmul.f32 %v497, %v644
    %v670 = vmul.f32 %v498, %v644
    %v671 = vmul.f32 %v499, %v644
    %v672 = vmul.f32 %v500, %v644
    %v673 = vmul.f32 %v501, %v644
    %v674 = vmul.f32 %v502, %v644
    %v675 = vmul.f32 %v503, %v644
    %v676 = vmul.f32 %v504, %v644
    %v677 = vmul.f32 %v645, 1.442695
    %v678 = vpow.pop %v677
    %v679 = vmul.f32 %v646, 1.442695
    %v680 = vpow.pop %v679
    %v681 = vmul.f32 %v647, 1.442695
    %v682 = vpow.pop %v681
    %v683 = vmul.f32 %v648, 1.442695
    %v684 = vpow.pop %v683
    %v685 = vmul.f32 %v649, 1.442695
    %v686 = vpow.pop %v685
    %v687 = vmul.f32 %v650, 1.442695
    %v688 = vpow.pop %v687
    %v689 = vmul.f32 %v651, 1.442695
    %v690 = vpow.pop %v689
    %v691 = vmul.f32 %v652, 1.442695
    %v692 = vpow.pop %v691
    %v693 = vmul.f32 %v653, 1.442695
    %v694 = vpow.pop %v693
    %v695 = vmul.f32 %v654, 1.442695
    %v696 = vpow.pop %v695
    %v697 = vmul.f32 %v655, 1.442695
    %v698 = vpow.pop %v697
    %v699 = vmul.f32 %v656, 1.442695
    %v700 = vpow.pop %v699
    %v701 = vmul.f32 %v657, 1.442695
    %v702 = vpow.pop %v701
    %v703 = vmul.f32 %v658, 1.442695
    %v704 = vpow.pop %v703
    %v705 = vmul.f32 %v659, 1.442695
    %v706 = vpow.pop %v705
    %v707 = vmul.f32 %v660, 1.442695
    %v708 = vpow.pop %v707
    %v709 = vmul.f32 %v661, 1.442695
    %v710 = vpow.pop %v709
    %v711 = vmul.f32 %v662, 1.442695
    %v712 = vpow.pop %v711
    %v713 = vmul.f32 %v663, 1.442695
    %v714 = vpow.pop %v713
    %v715 = vmul.f32 %v664, 1.442695
    %v716 = vpow.pop %v715
    %v717 = vmul.f32 %v665, 1.442695
    %v718 = vpow.pop %v717
    %v719 = vmul.f32 %v666, 1.442695
    %v720 = vpow.pop %v719
    %v721 = vmul.f32 %v667, 1.442695
    %v722 = vpow.pop %v721
    %v723 = vmul.f32 %v668, 1.442695
    %v724 = vpow.pop %v723
    %v725 = vmul.f32 %v669, 1.442695
    %v726 = vpow.pop %v725
    %v727 = vmul.f32 %v670, 1.442695
    %v728 = vpow.pop %v727
    %v729 = vmul.f32 %v671, 1.442695
    %v730 = vpow.pop %v729
    %v731 = vmul.f32 %v672, 1.442695
    %v732 = vpow.pop %v731
    %v733 = vmul.f32 %v673, 1.442695
    %v734 = vpow.pop %v733
    %v735 = vmul.f32 %v674, 1.442695
    %v736 = vpow.pop %v735
    %v737 = vmul.f32 %v675, 1.442695
    %v738 = vpow.pop %v737
    %v739 = vmul.f32 %v676, 1.442695
    %v740 = vpow.pop %v739
    %v741 = vlaneseq
    %v742 = vshrl.u32 %v741, 7
    %v743 = vsub.s32 3, %v742
    %v744 = vrot.slane %v16, %v743
    %v745 = vmul.f32 %v744, %v678
    %v746 = vmul.f32 %v744, %v680
    %v747 = vmul.f32 %v744, %v682
    %v748 = vmul.f32 %v744, %v684
    %v749 = vmul.f32 %v744, %v686
    %v750 = vmul.f32 %v744, %v688
    %v751 = vmul.f32 %v744, %v690
    %v752 = vmul.f32 %v744, %v692
    %v753 = vmul.f32 %v744, %v694
    %v754 = vmul.f32 %v744, %v696
    %v755 = vmul.f32 %v744, %v698
    %v756 = vmul.f32 %v744, %v700
    %v757 = vmul.f32 %v744, %v702
    %v758 = vmul.f32 %v744, %v704
    %v759 = vmul.f32 %v744, %v706
    %v760 = vmul.f32 %v744, %v708
    %v761 = vmul.f32 %v744, %v710
    %v762 = vmul.f32 %v744, %v712
    %v763 = vmul.f32 %v744, %v714
    %v764 = vmul.f32 %v744, %v716
    %v765 = vmul.f32 %v744, %v718
    %v766 = vmul.f32 %v744, %v720
    %v767 = vmul.f32 %v744, %v722
    %v768 = vmul.f32 %v744, %v724
    %v769 = vmul.f32 %v744, %v726
    %v770 = vmul.f32 %v744, %v728
    %v771 = vmul.f32 %v744, %v730
    %v772 = vmul.f32 %v744, %v732
    %v773 = vmul.f32 %v744, %v734
    %v774 = vmul.f32 %v744, %v736
    %v775 = vmul.f32 %v744, %v738
    %v776 = vmul.f32 %v744, %v740
    %v777 = vsub.f32 %v609, %v745
    %v778 = vsub.f32 %v610, %v746
    %v779 = vsub.f32 %v611, %v747
    %v780 = vsub.f32 %v612, %v748
    %v781 = vsub.f32 %v613, %v749
    %v782 = vsub.f32 %v614, %v750
    %v783 = vsub.f32 %v615, %v751
    %v784 = vsub.f32 %v616, %v752
    %v785 = vsub.f32 %v617, %v753
    %v786 = vsub.f32 %v618, %v754
    %v787 = vsub.f32 %v619, %v755
    %v788 = vsub.f32 %v620, %v756
    %v789 = vsub.f32 %v621, %v757
    %v790 = vsub.f32 %v622, %v758
    %v791 = vsub.f32 %v623, %v759
    %v792 = vsub.f32 %v624, %v760
    %v793 = vsub.f32 %v625, %v761
    %v794 = vsub.f32 %v626, %v762
    %v795 = vsub.f32 %v627, %v763
    %v796 = vsub.f32 %v628, %v764
    %v797 = vsub.f32 %v629, %v765
    %v798 = vsub.f32 %v630, %v766
    %v799 = vsub.f32 %v631, %v767
    %v800 = vsub.f32 %v632, %v768
    %v801 = vsub.f32 %v633, %v769
    %v802 = vsub.f32 %v634, %v770
    %v803 = vsub.f32 %v635, %v771
    %v804 = vsub.f32 %v636, %v772
    %v805 = vsub.f32 %v637, %v773
    %v806 = vsub.f32 %v638, %v774
    %v807 = vsub.f32 %v639, %v775
    %v808 = vsub.f32 %v640, %v776
    %v809 = vpack.c.bf16 %v778, %v777
    %v810 = vpack.c.bf16 %v780, %v779
    %v811 = vpack.c.bf16 %v782, %v781
    %v812 = vpack.c.bf16 %v784, %v783
    %v813 = vpack.c.bf16 %v786, %v785
    %v814 = vpack.c.bf16 %v788, %v787
    %v815 = vpack.c.bf16 %v790, %v789
    %v816 = vpack.c.bf16 %v792, %v791
    %v817 = vpack.c.bf16 %v794, %v793
    %v818 = vpack.c.bf16 %v796, %v795
    %v819 = vpack.c.bf16 %v798, %v797
    %v820 = vpack.c.bf16 %v800, %v799
    %v821 = vpack.c.bf16 %v802, %v801
    %v822 = vpack.c.bf16 %v804, %v803
    %v823 = vpack.c.bf16 %v806, %v805
    %v824 = vpack.c.bf16 %v808, %v807
    %v825 = vld [vmem:[%s0] sm:$0xff]
    %v826 = vld [vmem:[%s0 + $0x8] sm:$0xff]
    %v829 = vunpack.c.l.b16 %v825
    %v830 = vunpack.c.h.b16 %v825
    %v831 = vunpack.c.l.b16 %v826
    %v832 = vunpack.c.h.b16 %v826
    %v833 = vpack.c.b16 %v831, %v829
    %v834 = vpack.c.b16 %v832, %v830
    %837 = vmatprep.subr.bf16.mxu0 0
    %838 = vmatpush1.bf16.msra.mxu0 %v809
    %839 = vmatprep.subr.bf16.mxu0 0
    %840 = vmatpush1.bf16.msra.mxu0 %v810
    %841 = vmatprep.subr.bf16.mxu0 0
    %842 = vmatpush1.bf16.msra.mxu0 %v811
    %843 = vmatprep.subr.bf16.mxu0 0
    %844 = vmatpush1.bf16.msra.mxu0 %v812
    %845 = vmatprep.subr.bf16.mxu0 0
    %846 = vmatpush1.bf16.msra.mxu0 %v813
    %847 = vmatprep.subr.bf16.mxu0 0
    %848 = vmatpush1.bf16.msra.mxu0 %v814
    %849 = vmatprep.subr.bf16.mxu0 0
    %850 = vmatpush1.bf16.msra.mxu0 %v815
    %851 = vmatprep.subr.bf16.mxu0 0
    %852 = vmatpush1.bf16.msra.mxu0 %v816
    %853 = vmatprep.subr.bf16.mxu0 0
    %854 = vmatpush1.bf16.msra.mxu0 %v817
    %855 = vmatprep.subr.bf16.mxu0 0
    %856 = vmatpush1.bf16.msra.mxu0 %v818
    %857 = vmatprep.subr.bf16.mxu0 0
    %858 = vmatpush1.bf16.msra.mxu0 %v819
    %859 = vmatprep.subr.bf16.mxu0 0
    %860 = vmatpush1.bf16.msra.mxu0 %v820
    %861 = vmatprep.subr.bf16.mxu0 0
    %862 = vmatpush1.bf16.msra.mxu0 %v821
    %863 = vmatprep.subr.bf16.mxu0 0
    %864 = vmatpush1.bf16.msra.mxu0 %v822
    %865 = vmatprep.subr.bf16.mxu0 0
    %866 = vmatpush1.bf16.msra.mxu0 %v823
    %867 = vmatprep.subr.bf16.mxu0 0
    %868 = vmatpush1.bf16.msra.mxu0 %v824
    %869 = vmatprep.mubr.bf16.mxu0 %v834
    %870 = vmatmul.mubr.bf16.gmra.mrb[0].mxu0 %v833
    %v871 = vpop.f32.mrb[0].mxu0
    %v872 = vadd.f32 0.0, %v871
    %v873 = vpop.f32.mrb[0].mxu0
    %v874 = vpop.f32.mrb[0].mxu0
    %v875 = vadd.f32 0.0, %v874
    %v876 = vpop.f32.mrb[0].mxu0
    %877 = vdwg.mxu0
    %p878 = scmp.eq.s32.totalorder 0, 0
    // Predicated region
    $region14: #{tpu_custom_call.1} parent=1 // pred_check
      %p879 = pneg %p878
    $region15: #{tpu_custom_call.1} parent=1 // pred_check_branch
      %881 = sbr.rel (%p879) target = $region17
    $region16: #{tpu_custom_call.1} parent=1 // pred_region
      %v882 = vlaneseq
      %v883 = vshrl.u32 %v882, 7
      %v884 = vsub.s32 6, %v883
      %v885 = vrot.slane %v16, %v884
      %v886 = vadd.f32 %v872, %v885
      %v887 = vadd.f32 %v875, %v885
      %888 = vst [vmem:[#allocation2] sm:$0xff] %v886
      %889 = vst [vmem:[#allocation2 + $0x8] sm:$0xff] %v887
    $region17: #{tpu_custom_call.1} parent=1 // pred_fallthru
      _
    %p890 = scmp.gt.s32.totalorder 0, 0
    // Predicated region
    $region18: #{tpu_custom_call.1} parent=1 // pred_check
      %p891 = pneg %p890
    $region19: #{tpu_custom_call.1} parent=1 // pred_check_branch
      %893 = sbr.rel (%p891) target = $region21
    $region20: #{tpu_custom_call.1} parent=1 // pred_region
      %v894 = vld [vmem:[#allocation2] sm:$0xff]
      %v895 = vld [vmem:[#allocation2 + $0x8] sm:$0xff]
      %v896 = vadd.f32 %v894, %v872
      %v897 = vadd.f32 %v895, %v875
      %898 = vst [vmem:[#allocation2] sm:$0xff] %v896
      %899 = vst [vmem:[#allocation2 + $0x8] sm:$0xff] %v897
    $region21: #{tpu_custom_call.1} parent=1 // pred_fallthru
      _
    // Predicated region
    $region22: #{tpu_custom_call.1} parent=1 // pred_check
      _
    $region23: #{tpu_custom_call.1} parent=1 // pred_check_branch
      %901 = sbr.rel (0) target = $region25
    $region24: #{tpu_custom_call.1} parent=1 // pred_region
      %s903 = ssub.s32 256, 256
      %904 = vsyncadd [#allocation3], %s903
      %s905 = sshll.u32 [#allocation2], 4
      %s906 = int_to_ptr.vmem [resolvable:$true] %s905
      %911 = dma.vmem_to_hbm [thread:$0]  %s906, 256, %s3, [#allocation3], 128, 128, 8
    $region25: #{tpu_custom_call.1} parent=1 // pred_fallthru
      _
    // Predicated region
    $region26: #{tpu_custom_call.1} parent=1 // pred_check
      _
    $region27: #{tpu_custom_call.1} parent=1 // pred_check_branch
      %913 = sbr.rel (0) target = $region29
    $region28: #{tpu_custom_call.1} parent=1 // pred_region
      %914 = dma.done [#allocation3], 256
    $region29: #{tpu_custom_call.1} parent=1 // pred_fallthru
      _
    %915 = vsyncpa [#allocation3], 1

</llo_original>
